<compile_context>
chip_gen: v7x
topology: tpu7x:2x2x1
jax: 0.10.0
libtpu: 0.0.40
codegen_flags: <defaults>
</compile_context>

<pallas_src>
import functools

import jax
import jax.numpy as jnp
from jax.experimental import pallas as pl
from jax.experimental.pallas import tpu as pltpu


def _conv_len(t, L, s):
    return (t - L) // s + 1


def _pool_len(t):                      # MaxPool1d(kernel=3, stride=2), no padding
    return (t - 3) // 2 + 1


# ----------------------------- fused Pallas kernel ---------------------------

def _encoder_fused_kernel(xp_ref, w1_ref, w2_ref, o_ref, *, L, N, N2, t_p2):
    """Fused conv1->pool->relu->conv2->pool->relu for one batch element.

    xp_ref : [1, L*L, n_y+1]  polyphase input: xp[r, t] = x[L*L*t + r]
    w1_ref : [3*N*L, L*L]     stacked stage-1 weights [W1e; W1oa; W1ob]
    w2_ref : [3*N2,  N*L]     stacked stage-2 weights [W2e; W2oa; W2ob]
    o_ref  : [1, N2, t_p2]    final NCL output (channels on sublanes, time on lanes)

    Phase conventions (stride = L//2, pool stride 2 => time downsample L/stage):
      row m*N + c of (W1e @ xp)  == conv1[c, 2*(L*t + m)]        (even positions)
      co1 = W1oa @ xp[:, t] + W1ob @ xp[:, t+1] == conv1[c, 2*(L*t+m)+1]
      y1ph[l*N + c, t] = relu(pool1[c, L*t + l])   (phase-split stage-1 output)
      ce2/co2 analogously from the stacked stage-2 weights against y1ph.
    """
    M1 = N * L                       # rows of y1ph == K of stage 2
    n_y = t_p2 + 1                   # y1ph columns needed (= ce2 columns)

    xp = xp_ref[0]                   # [L*L, n_y + 1]

    # ---- stage 1: conv1 (even+odd positions) -> maxpool(3,2) -> relu --------
    r1 = jnp.dot(w1_ref[...], xp, preferred_element_type=jnp.float32)  # [3*M1, n_y+1]
    ce1 = r1[0:M1, :]                                          # conv1 @ even positions
    co1 = r1[M1:2 * M1, 0:n_y] + r1[2 * M1:3 * M1, 1:n_y + 1]  # conv1 @ odd positions
    # pool window at phase l needs conv-even phase l+1 (phase 0 of t+1 when l==L-1)
    ce1n = jnp.concatenate([ce1[N:M1, 0:n_y], ce1[0:N, 1:n_y + 1]], axis=0)
    y1 = jnp.maximum(jnp.maximum(ce1[:, 0:n_y], co1), ce1n)
    y1 = jnp.maximum(y1, 0.0)                                  # [M1, n_y], relu'd

    # ---- stage 2: conv2 (even+odd positions) -> maxpool(3,2) -> relu --------
    r2 = jnp.dot(w2_ref[...], y1, preferred_element_type=jnp.float32)  # [3*N2, n_y]
    ce2 = r2[0:N2, :]
    co2 = r2[N2:2 * N2, 0:t_p2] + r2[2 * N2:3 * N2, 1:t_p2 + 1]
    out = jnp.maximum(jnp.maximum(ce2[:, 0:t_p2], co2), ce2[:, 1:t_p2 + 1])
    o_ref[0] = jnp.maximum(out, 0.0).astype(o_ref.dtype)      # NCL, time on lanes


# ------------------------------- JAX wrapper ----------------------------------

def encoder_forward(mixture, w1, w2, L):
    """mixture [B, T], w1 [N, 1, L], w2 [2N, N, L] -> [B, 2N, T_out] (NCL)."""
    stride = L // 2
    assert stride * 2 == L, "Encoder assumes an even kernel size L"
    B, T = mixture.shape
    N = w1.shape[0]
    N2 = w2.shape[0]

    t_p1 = _pool_len(_conv_len(T, L, stride))
    t_p2 = _pool_len(_conv_len(t_p1, L, stride))
    assert t_p2 >= 1, "input too short for two conv+pool stages"

    n_y = t_p2 + 1                    # phase-time columns of the intermediate
    n_ce = n_y + 1                    # +1 column for the (t+1) accesses
    K1 = L * L                        # input polyphase period / stage-1 K
    K2 = N * L                        # stage-2 K

    # Polyphase input: xp[b, r, t] = x[b, K1*t + r]  (one cheap XLA pass over x;
    # zero-pad so unused trailing phase entries never read out of bounds).
    need = K1 * n_ce
    if T >= need:
        x_use = mixture[:, :need]
    else:
        x_use = jnp.pad(mixture, ((0, 0), (0, need - T)))
    xp = jnp.transpose(x_use.reshape(B, n_ce, K1), (0, 2, 1))      # [B, K1, n_ce]

    # Stage-1 block-structured weights (rows ordered phase-major: m*N + c).
    w1_mat = w1[:, 0, :].astype(jnp.float32)                       # [N, L]
    w1e = jnp.kron(jnp.eye(L, dtype=jnp.float32), w1_mat)          # [N*L, K1]
    w1oa = w1e @ jnp.eye(K1, K1, k=stride, dtype=jnp.float32)      # odd pos, same t
    w1ob = w1e @ jnp.eye(K1, K1, k=stride - K1, dtype=jnp.float32)  # odd pos, t+1
    w1stack = jnp.concatenate([w1e, w1oa, w1ob], axis=0)           # [3*N*L, K1]

    # Stage-2 weights: columns ordered to match y1ph rows (l*N + c).
    w2e = jnp.transpose(w2.astype(jnp.float32), (0, 2, 1)).reshape(N2, K2)
    w2oa = w2e @ jnp.eye(K2, K2, k=stride * N, dtype=jnp.float32)
    w2ob = w2e @ jnp.eye(K2, K2, k=stride * N - K2, dtype=jnp.float32)
    w2stack = jnp.concatenate([w2e, w2oa, w2ob], axis=0)           # [3*N2, K2]

    kernel = functools.partial(_encoder_fused_kernel, L=L, N=N, N2=N2, t_p2=t_p2)
    return pl.pallas_call(
        kernel,
        out_shape=jax.ShapeDtypeStruct((B, N2, t_p2), jnp.float32),
        grid=(B,),
        in_specs=[
            pl.BlockSpec((1, K1, n_ce), lambda b: (b, 0, 0)),
            # Constant index maps: weight blocks stay resident across grid steps.
            pl.BlockSpec((3 * N * L, K1), lambda b: (0, 0)),
            pl.BlockSpec((3 * N2, K2), lambda b: (0, 0)),
        ],
        out_specs=pl.BlockSpec((1, N2, t_p2), lambda b: (b, 0, 0)),
        compiler_params=pltpu.CompilerParams(dimension_semantics=("parallel",)),
    )(xp, w1stack, w2stack)


# --------------------------- pure-JAX reference -------------------------------

def _reference_forward(mixture, w1, w2, L):
    stride = L // 2
    x = mixture[:, None, :]

    def conv1d(x, w, s):
        return jax.lax.conv_general_dilated(
            x, w, window_strides=(s,), padding="VALID",
            dimension_numbers=("NCH", "OIH", "NCH"))

    def maxpool3s2(x):
        return jax.lax.reduce_window(
            x, -jnp.inf, jax.lax.max, (1, 1, 3), (1, 1, 2), "VALID")

    y = jax.nn.relu(maxpool3s2(conv1d(x, w1, stride)))
    y = jax.nn.relu(maxpool3s2(conv1d(y, w2, stride)))
    return y


# ---------------------------------- main ---------------------------------------

if __name__ == "__main__":
    L, N = 4, 8          # Encoder(L, N)
    B, T = 2, 256        # small input consistent with the module

    key = jax.random.PRNGKey(0)
    k_x, k_w1, k_w2 = jax.random.split(key, 3)

    mixture = jax.random.normal(k_x, (B, T), dtype=jnp.float32)
    # Deterministic synthetic weights (PyTorch shapes: [C_out, C_in, L]).
    w1 = jax.random.normal(k_w1, (N, 1, L), dtype=jnp.float32) * 0.1
    w2 = jax.random.normal(k_w2, (2 * N, N, L), dtype=jnp.float32) * 0.1

    fwd = jax.jit(encoder_forward, static_argnames=("L",))
    out = jax.block_until_ready(fwd(mixture, w1, w2, L=L))

    ref = _reference_forward(mixture, w1, w2, L)
    assert out.shape == ref.shape, (out.shape, ref.shape)
    # Tolerance covers the MXU's default-precision f32 matmul path.
    err = float(jnp.max(jnp.abs(out - ref)))
    assert jnp.allclose(out, ref, atol=2e-2, rtol=2e-2), err

    print("KERNEL_OK")
</pallas_src>

<mosaic_0001>
module attributes {stable_mosaic.version = 11 : i64} {
  func.func @_encoder_fused_kernel(%arg0: i32, %arg1: memref<1x16x16xf32, #tpu.memory_space<vmem>>, %arg2: memref<96x16xf32, #tpu.memory_space<vmem>>, %arg3: memref<48x32xf32, #tpu.memory_space<vmem>>, %arg4: memref<1x16x14xf32, #tpu.memory_space<vmem>>) attributes {dimension_semantics = [#tpu.dimension_semantics<parallel>], iteration_bounds = array<i64: 2>, scalar_prefetch = 0 : i64, scratch_operands = 0 : i64, tpu.core_type = #tpu.core_type<tc>, window_params = [{transform_indices = @transform_0, window_bounds = array<i64: 1, 16, 16>}, {pipeline_mode = #tpu.pipeline_mode<synchronous>, transform_indices = @transform_1, window_bounds = array<i64: 96, 16>}, {pipeline_mode = #tpu.pipeline_mode<synchronous>, transform_indices = @transform_2, window_bounds = array<i64: 48, 32>}, {transform_indices = @transform_3, window_bounds = array<i64: 1, 16, 14>}]} {
    %c0 = arith.constant 0 : index
    %c0_0 = arith.constant 0 : index
    %c0_1 = arith.constant 0 : index
    %0 = vector.load %arg1[%c0, %c0_0, %c0_1] : memref<1x16x16xf32, #tpu.memory_space<vmem>>, vector<1x16x16xf32>
    %1 = vector.shape_cast %0 : vector<1x16x16xf32> to vector<16x16xf32>
    %c0_2 = arith.constant 0 : index
    %c0_3 = arith.constant 0 : index
    %2 = vector.load %arg2[%c0_2, %c0_3] : memref<96x16xf32, #tpu.memory_space<vmem>>, vector<96x16xf32>
    %cst = arith.constant dense<0.000000e+00> : vector<96x16xf32>
    %3 = tpu.matmul %2, %1, %cst {dimension_numbers = #tpu.dot_dimension_numbers<[1], [0], [0], [1], [0, 0, 1, 1], [], []>} : vector<96x16xf32>, vector<16x16xf32>, vector<96x16xf32> -> vector<96x16xf32>
    %4 = vector.extract_strided_slice %3 {offsets = [0, 0], sizes = [32, 16], strides = [1, 1]} : vector<96x16xf32> to vector<32x16xf32>
    %5 = vector.extract_strided_slice %3 {offsets = [32, 0], sizes = [32, 15], strides = [1, 1]} : vector<96x16xf32> to vector<32x15xf32>
    %6 = vector.extract_strided_slice %3 {offsets = [64, 1], sizes = [32, 15], strides = [1, 1]} : vector<96x16xf32> to vector<32x15xf32>
    %7 = arith.addf %5, %6 : vector<32x15xf32>
    %8 = vector.extract_strided_slice %4 {offsets = [8, 0], sizes = [24, 15], strides = [1, 1]} : vector<32x16xf32> to vector<24x15xf32>
    %9 = vector.extract_strided_slice %4 {offsets = [0, 1], sizes = [8, 15], strides = [1, 1]} : vector<32x16xf32> to vector<8x15xf32>
    %10 = tpu.concatenate %8, %9 in 0 : vector<24x15xf32>, vector<8x15xf32> -> vector<32x15xf32>
    %11 = vector.extract_strided_slice %4 {offsets = [0, 0], sizes = [32, 15], strides = [1, 1]} : vector<32x16xf32> to vector<32x15xf32>
    %12 = arith.maximumf %11, %7 : vector<32x15xf32>
    %13 = arith.maximumf %12, %10 : vector<32x15xf32>
    %cst_4 = arith.constant 0.000000e+00 : f32
    %14 = vector.broadcast %cst_4 : f32 to vector<32x15xf32>
    %15 = arith.maximumf %13, %14 : vector<32x15xf32>
    %c0_5 = arith.constant 0 : index
    %c0_6 = arith.constant 0 : index
    %16 = vector.load %arg3[%c0_5, %c0_6] : memref<48x32xf32, #tpu.memory_space<vmem>>, vector<48x32xf32>
    %cst_7 = arith.constant dense<0.000000e+00> : vector<48x15xf32>
    %17 = tpu.matmul %16, %15, %cst_7 {dimension_numbers = #tpu.dot_dimension_numbers<[1], [0], [0], [1], [0, 0, 1, 1], [], []>} : vector<48x32xf32>, vector<32x15xf32>, vector<48x15xf32> -> vector<48x15xf32>
    %18 = vector.extract_strided_slice %17 {offsets = [0, 0], sizes = [16, 15], strides = [1, 1]} : vector<48x15xf32> to vector<16x15xf32>
    %19 = vector.extract_strided_slice %17 {offsets = [16, 0], sizes = [16, 14], strides = [1, 1]} : vector<48x15xf32> to vector<16x14xf32>
    %20 = vector.extract_strided_slice %17 {offsets = [32, 1], sizes = [16, 14], strides = [1, 1]} : vector<48x15xf32> to vector<16x14xf32>
    %21 = arith.addf %19, %20 : vector<16x14xf32>
    %22 = vector.extract_strided_slice %18 {offsets = [0, 0], sizes = [16, 14], strides = [1, 1]} : vector<16x15xf32> to vector<16x14xf32>
    %23 = arith.maximumf %22, %21 : vector<16x14xf32>
    %24 = vector.extract_strided_slice %18 {offsets = [0, 1], sizes = [16, 14], strides = [1, 1]} : vector<16x15xf32> to vector<16x14xf32>
    %25 = arith.maximumf %23, %24 : vector<16x14xf32>
    %cst_8 = arith.constant 0.000000e+00 : f32
    %26 = vector.broadcast %cst_8 : f32 to vector<16x14xf32>
    %27 = arith.maximumf %25, %26 : vector<16x14xf32>
    %c0_9 = arith.constant 0 : index
    %c0_10 = arith.constant 0 : index
    %c0_11 = arith.constant 0 : index
    %28 = vector.load %arg4[%c0_9, %c0_10, %c0_11] : memref<1x16x14xf32, #tpu.memory_space<vmem>>, vector<1x16x14xf32>
    %29 = vector.shape_cast %28 : vector<1x16x14xf32> to vector<16x14xf32>
    %30 = vector.shape_cast %27 : vector<16x14xf32> to vector<1x16x14xf32>
    tpu.vector_store %arg4[%c0_9, %c0_10, %c0_11], %30 {strides = array<i32>} : memref<1x16x14xf32, #tpu.memory_space<vmem>>, vector<1x16x14xf32>,
    return
  }
  func.func @transform_0(%arg0: i32) -> (i32, i32, i32) {
    %c0_i32 = arith.constant 0 : i32
    %c0_i32_0 = arith.constant 0 : i32
    %c0_i32_1 = arith.constant 0 : i32
    return %arg0, %c0_i32, %c0_i32_0 : i32, i32, i32
  }
  func.func @transform_1(%arg0: i32) -> (i32, i32) {
    %c0_i32 = arith.constant 0 : i32
    %c0_i32_0 = arith.constant 0 : i32
    %c0_i32_1 = arith.constant 0 : i32
    return %c0_i32, %c0_i32_0 : i32, i32
  }
  func.func @transform_2(%arg0: i32) -> (i32, i32) {
    %c0_i32 = arith.constant 0 : i32
    %c0_i32_0 = arith.constant 0 : i32
    %c0_i32_1 = arith.constant 0 : i32
    return %c0_i32, %c0_i32_0 : i32, i32
  }
  func.func @transform_3(%arg0: i32) -> (i32, i32, i32) {
    %c0_i32 = arith.constant 0 : i32
    %c0_i32_0 = arith.constant 0 : i32
    %c0_i32_1 = arith.constant 0 : i32
    return %arg0, %c0_i32, %c0_i32_0 : i32, i32, i32
  }
}

</mosaic_0001>

<llo_original>
// kernel: encoder_forward.1
$region0: #{encoder_forward.1}
  #allocation0 [shape = 'u32[]', space=smem, size = 0x4, offset = 0x4, fixed_abs, tag = 'smem constant byte address 0x4 - core index']
  #allocation1 [shape = 'u32[144,128]{1,0:T(1,128)}', space=vmem, size = 0x12000, scoped, tag = 'internal scratch']
  %s0 = inlined_call_operand.vmem [shape: f32[2,16,16], index: 0, kind: input, shape index: {}]
  %s1 = inlined_call_operand.vmem [shape: f32[96,16], index: 1, kind: input, shape index: {}]
  %s2 = inlined_call_operand.vmem [shape: f32[48,32], index: 2, kind: input, shape index: {}]
  %s3 = inlined_call_operand.vmem [shape: f32[2,16,14], index: 3, kind: output, shape index: {}]
  %s4 = sld [smem:[#allocation0]]
  $region45: #{encoder_forward.1} parent=0
    _
  %s6 = ssub.s32 1, %s4
  %s7 = scalar_select 0, %s6, %s4
  loop: start=0, step=1, limit=4
  $region2: #{encoder_forward.1} parent=0 // loop_pre_header
    _
  $region3: #{encoder_forward.1} parent=0 // loop_header
    %s9 = sphi 0, %s13
    %p10 = scmp.ge.s32.totalorder %s9, 4
    %s19 = sphi 0, %s21
    %s22 = sphi 0, %s19
    %s23 = sphi 0, %s22
    %s39 = sphi 0, %s23
    %s43 = sphi 0, %s43
    %s45 = sphi 0, %s43
    %s46 = sphi 0, %s45
    %s60 = sphi 0, %s46
    %s64 = sphi 0, %s64
    %s66 = sphi 0, %s64
    %s67 = sphi 0, %s66
    %s81 = sphi 0, %s67
    %s87 = sphi 0, %s89
    %s90 = sphi 0, %s87
    %s91 = sphi 0, %s90
    %s107 = sphi 0, %s91
  $region4: #{encoder_forward.1} parent=0 // loop_header_branch
    %12 = sbr.rel (%p10) target = $region8
  $region5: #{encoder_forward.1} parent=0 // loop_body
    %s14 = ssub.s32 %s9, 1
    %s15 = ssub.s32 %s9, 2
    %s16 = sadd.s32 %s9, 1
    %s17 = ssub.s32 %s9, %s16
    %p18 = scmp.eq.s32.totalorder %s17, 0
    %s20 = sadd.s32 %s19, 1
    %s21 = scalar_select %p18, %s19, %s20
    %p24 = pneg %p18
    %p25 = scmp.eq.s32.totalorder %s9, 1
    %p26 = por %p24, %p25
    %p27 = scmp.ne.s32.totalorder %s19, %s22
    %p28 = scmp.eq.s32.totalorder %s9, 0
    %p29 = por %p27, %p28
    %p30 = scmp.ne.s32.totalorder %s19, %s22
    %p31 = scmp.eq.s32.totalorder %s14, 1
    %p32 = por %p30, %p31
    %p33 = scmp.ne.s32.totalorder %s22, %s23
    %p34 = scmp.eq.s32.totalorder %s14, 0
    %p35 = por %p33, %p34
    %p36 = scmp.ne.s32.totalorder %s22, %s23
    %p37 = scmp.eq.s32.totalorder %s15, 1
    %p38 = por %p36, %p37
    %p40 = scmp.ne.s32.totalorder %s23, %s39
    %p41 = scmp.eq.s32.totalorder %s15, 0
    %p42 = por %p40, %p41
    %s44 = sadd.s32 %s43, 1
    %p47 = scmp.eq.s32.totalorder %s9, 1
    %p48 = scmp.ne.s32.totalorder %s43, %s45
    %p49 = scmp.eq.s32.totalorder %s9, 0
    %p50 = por %p48, %p49
    %p51 = scmp.ne.s32.totalorder %s43, %s45
    %p52 = scmp.eq.s32.totalorder %s14, 1
    %p53 = por %p51, %p52
    %p54 = scmp.ne.s32.totalorder %s45, %s46
    %p55 = scmp.eq.s32.totalorder %s14, 0
    %p56 = por %p54, %p55
    %p57 = scmp.ne.s32.totalorder %s45, %s46
    %p58 = scmp.eq.s32.totalorder %s15, 1
    %p59 = por %p57, %p58
    %p61 = scmp.ne.s32.totalorder %s46, %s60
    %p62 = scmp.eq.s32.totalorder %s15, 0
    %p63 = por %p61, %p62
    %s65 = sadd.s32 %s64, 1
    %p68 = scmp.eq.s32.totalorder %s9, 1
    %p69 = scmp.ne.s32.totalorder %s64, %s66
    %p70 = scmp.eq.s32.totalorder %s9, 0
    %p71 = por %p69, %p70
    %p72 = scmp.ne.s32.totalorder %s64, %s66
    %p73 = scmp.eq.s32.totalorder %s14, 1
    %p74 = por %p72, %p73
    %p75 = scmp.ne.s32.totalorder %s66, %s67
    %p76 = scmp.eq.s32.totalorder %s14, 0
    %p77 = por %p75, %p76
    %p78 = scmp.ne.s32.totalorder %s66, %s67
    %p79 = scmp.eq.s32.totalorder %s15, 1
    %p80 = por %p78, %p79
    %p82 = scmp.ne.s32.totalorder %s67, %s81
    %p83 = scmp.eq.s32.totalorder %s15, 0
    %p84 = por %p82, %p83
    %s85 = ssub.s32 %s9, %s16
    %p86 = scmp.eq.s32.totalorder %s85, 0
    %s88 = sadd.s32 %s87, 1
    %s89 = scalar_select %p86, %s87, %s88
    %p92 = pneg %p86
    %p93 = scmp.eq.s32.totalorder %s9, 1
    %p94 = por %p92, %p93
    %p95 = scmp.ne.s32.totalorder %s87, %s90
    %p96 = scmp.eq.s32.totalorder %s9, 0
    %p97 = por %p95, %p96
    %p98 = scmp.ne.s32.totalorder %s87, %s90
    %p99 = scmp.eq.s32.totalorder %s14, 1
    %p100 = por %p98, %p99
    %p101 = scmp.ne.s32.totalorder %s90, %s91
    %p102 = scmp.eq.s32.totalorder %s14, 0
    %p103 = por %p101, %p102
    %p104 = scmp.ne.s32.totalorder %s90, %s91
    %p105 = scmp.eq.s32.totalorder %s15, 1
    %p106 = por %p104, %p105
    %p108 = scmp.ne.s32.totalorder %s91, %s107
    %p109 = scmp.eq.s32.totalorder %s15, 0
    %p110 = por %p108, %p109
    %p111 = scmp.le.s32.totalorder 1, %s9
    %p112 = scmp.lt.s32.totalorder %s9, 3
    %p113 = pnand %p111, %p112
    %p114 = pneg %p113
    // Predicated region
    $region9: #{encoder_forward.1} parent=5 // pred_check
      _
    $region10: #{encoder_forward.1} parent=5 // pred_check_branch
      %116 = sbr.rel (%p113) target = $region12
    $region11: #{encoder_forward.1} parent=5 // pred_region
      %s117 = ssub.s32 %s9, 1
      // Predicated region
      $region13: #{encoder_forward.1} parent=11 // pred_check
        %p118 = pneg %p56
      $region14: #{encoder_forward.1} parent=11 // pred_check_branch
        %120 = sbr.rel (%p118) target = $region16
      $region15: #{encoder_forward.1} parent=11 // pred_region
        _
      $region16: #{encoder_forward.1} parent=11 // pred_fallthru
        _
      // Predicated region
      $region17: #{encoder_forward.1} parent=11 // pred_check
        %p121 = pneg %p77
      $region18: #{encoder_forward.1} parent=11 // pred_check_branch
        %123 = sbr.rel (%p121) target = $region20
      $region19: #{encoder_forward.1} parent=11 // pred_region
        _
      $region20: #{encoder_forward.1} parent=11 // pred_fallthru
        _
    $region12: #{encoder_forward.1} parent=5 // pred_fallthru
      _
    %p124 = scmp.lt.s32.totalorder %s9, 2
    // Predicated region
    $region21: #{encoder_forward.1} parent=5 // pred_check
      %p125 = pneg %p124
    $region22: #{encoder_forward.1} parent=5 // pred_check_branch
      %127 = sbr.rel (%p125) target = $region24
    $region23: #{encoder_forward.1} parent=5 // pred_region
      // Predicated region
      $region25: #{encoder_forward.1} parent=23 // pred_check
        %p128 = pneg %p29
      $region26: #{encoder_forward.1} parent=23 // pred_check_branch
        %130 = sbr.rel (%p128) target = $region28
      $region27: #{encoder_forward.1} parent=23 // pred_region
        %p131 = scmp.lt.s32.totalorder %s9, 1
        %s132 = scalar_select %p131, %s9, 1
        %s133 = smul.addr %s132, 2
        %s134 = smul.addr %s133, 8
        %s135 = scalar_lea.vmem %s0, %s134
      $region28: #{encoder_forward.1} parent=23 // pred_fallthru
        _
    $region24: #{encoder_forward.1} parent=5 // pred_fallthru
      _
    %p136 = scmp.le.s32.totalorder 1, %s9
    %p137 = scmp.lt.s32.totalorder %s9, 3
    %p138 = pnand %p136, %p137
    %p139 = pneg %p138
    // Predicated region
    $region29: #{encoder_forward.1} parent=5 // pred_check
      _
    $region30: #{encoder_forward.1} parent=5 // pred_check_branch
      %141 = sbr.rel (%p138) target = $region32
    $region31: #{encoder_forward.1} parent=5 // pred_region
      %s142 = ssub.s32 %s9, 1
      %p143 = scmp.lt.s32.totalorder %s14, 1
      %s144 = scalar_select %p143, %s14, 1
      %s145 = smul.addr %s144, 2
      %s146 = smul.addr %s145, 8
      %s147 = scalar_lea.vmem %s0, %s146
      %p148 = pneg %p35
      %p149 = pneg %p32
      %p150 = pneg %p56
      %p151 = pneg %p53
      %p152 = pneg %p77
      %p153 = pneg %p74
      %p154 = pneg %p103
      %p155 = pneg %p100
      %p156 = scmp.lt.s32.totalorder %s14, 1
      %s157 = scalar_select %p156, %s14, 1
      %s158 = smul.addr %s157, 2
      %s159 = smul.addr %s158, 8
      %s160 = scalar_lea.vmem %s3, %s159
      %p161 = scmp.lt.s32.totalorder %s14, 1
      %s162 = scalar_select %p161, %s14, 1
      %s163 = smul.addr %s162, 2
      %s164 = smul.addr %s163, 8
      %s165 = scalar_lea.vmem %s0, %s164
      %p166 = scmp.lt.s32.totalorder %s14, 1
      %s167 = scalar_select %p166, %s14, 1
      %s168 = smul.addr %s167, 2
      %s169 = smul.addr %s168, 8
      %s170 = scalar_lea.vmem %s3, %s169
      %v171 = vld [vmem:[%s165] sm:$0xff]
      %v172 = vld [vmem:[%s165 + $0x8] sm:$0xff]
      %v173 = vld [vmem:[%s1] sm:$0xff]
      %v174 = vld [vmem:[%s1 + $0x8] sm:$0xff]
      %v175 = vld [vmem:[%s1 + $0x10] sm:$0xff]
      %v176 = vld [vmem:[%s1 + $0x18] sm:$0xff]
      %v177 = vld [vmem:[%s1 + $0x20] sm:$0xff]
      %v178 = vld [vmem:[%s1 + $0x28] sm:$0xff]
      %v179 = vld [vmem:[%s1 + $0x30] sm:$0xff]
      %v180 = vld [vmem:[%s1 + $0x38] sm:$0xff]
      %v181 = vld [vmem:[%s1 + $0x40] sm:$0xff]
      %v182 = vld [vmem:[%s1 + $0x48] sm:$0xff]
      %v183 = vld [vmem:[%s1 + $0x50] sm:$0xff]
      %v184 = vld [vmem:[%s1 + $0x58] sm:$0xff]
      %vm185 = vcmask 130048
      %v187 = vsel %vm185, %v173, 0
      %v190 = vsel %vm185, %v174, 0
      %v193 = vsel %vm185, %v175, 0
      %v196 = vsel %vm185, %v176, 0
      %v199 = vsel %vm185, %v177, 0
      %v202 = vsel %vm185, %v178, 0
      %v205 = vsel %vm185, %v179, 0
      %v208 = vsel %vm185, %v180, 0
      %v211 = vsel %vm185, %v181, 0
      %v214 = vsel %vm185, %v182, 0
      %v217 = vsel %vm185, %v183, 0
      %v220 = vsel %vm185, %v184, 0
      %222 = vmatprep.subr.mxu0 0.0
      %223 = vmatpush1.msra.mxu0 %v171
      %224 = vmatprep.subr.mxu0 0.0
      %225 = vmatpush1.msra.mxu0 %v172
      %226 = vmatprep.subr.mxu0 0.0
      %227 = vmatpush1.msra.mxu0 0.0
      %228 = vmatprep.subr.mxu0 0.0
      %229 = vmatpush1.msra.mxu0 0.0
      %230 = vmatprep.subr.mxu0 0.0
      %231 = vmatpush1.msra.mxu0 0.0
      %232 = vmatprep.subr.mxu0 0.0
      %233 = vmatpush1.msra.mxu0 0.0
      %234 = vmatprep.subr.mxu0 0.0
      %235 = vmatpush1.msra.mxu0 0.0
      %236 = vmatprep.subr.mxu0 0.0
      %237 = vmatpush1.msra.mxu0 0.0
      %238 = vmatprep.subr.mxu0 0.0
      %239 = vmatpush1.msra.mxu0 0.0
      %240 = vmatprep.subr.mxu0 0.0
      %241 = vmatpush1.msra.mxu0 0.0
      %242 = vmatprep.subr.mxu0 0.0
      %243 = vmatpush1.msra.mxu0 0.0
      %244 = vmatprep.subr.mxu0 0.0
      %245 = vmatpush1.msra.mxu0 0.0
      %246 = vmatprep.subr.mxu0 0.0
      %247 = vmatpush1.msra.mxu0 0.0
      %248 = vmatprep.subr.mxu0 0.0
      %249 = vmatpush1.msra.mxu0 0.0
      %250 = vmatprep.subr.mxu0 0.0
      %251 = vmatpush1.msra.mxu0 0.0
      %252 = vmatprep.subr.mxu0 0.0
      %253 = vmatpush1.msra.mxu0 0.0
      %254 = vmatprep.subr.mxu0 0.0
      %255 = vmatpush1.msra.mxu0 0.0
      %256 = vmatprep.subr.mxu0 0.0
      %257 = vmatpush1.msra.mxu0 0.0
      %258 = vmatprep.subr.mxu0 0.0
      %259 = vmatpush1.msra.mxu0 0.0
      %260 = vmatprep.subr.mxu0 0.0
      %261 = vmatpush1.msra.mxu0 0.0
      %262 = vmatprep.subr.mxu0 0.0
      %263 = vmatpush1.msra.mxu0 0.0
      %264 = vmatprep.subr.mxu0 0.0
      %265 = vmatpush1.msra.mxu0 0.0
      %266 = vmatprep.subr.mxu0 0.0
      %267 = vmatpush1.msra.mxu0 0.0
      %268 = vmatprep.subr.mxu0 0.0
      %269 = vmatpush1.msra.mxu0 0.0
      %270 = vmatprep.subr.mxu0 0.0
      %271 = vmatpush1.msra.mxu0 0.0
      %272 = vmatprep.subr.mxu0 0.0
      %273 = vmatpush1.msra.mxu0 0.0
      %274 = vmatprep.subr.mxu0 0.0
      %275 = vmatpush1.msra.mxu0 0.0
      %276 = vmatprep.subr.mxu0 0.0
      %277 = vmatpush1.msra.mxu0 0.0
      %278 = vmatprep.subr.mxu0 0.0
      %279 = vmatpush1.msra.mxu0 0.0
      %280 = vmatprep.subr.mxu0 0.0
      %281 = vmatpush1.msra.mxu0 0.0
      %282 = vmatprep.subr.mxu0 0.0
      %283 = vmatpush1.msra.mxu0 0.0
      %284 = vmatprep.subr.mxu0 0.0
      %285 = vmatpush1.msra.mxu0 0.0
      %286 = vmatprep.mubr.f32.mxu0 0.0
      %287 = vmatmul.mubr.f32.gmra.mrb[0].mxu0 %v187
      %v288 = vpop.f32.mrb[0].mxu0
      %v289 = vadd.f32 0.0, %v288
      %v290 = vpop.f32.mrb[0].mxu0
      %291 = vmatprep.mubr.f32.mxu0 0.0
      %292 = vmatmul.mubr.f32.gmra.mrb[0].mxu0 %v190
      %v293 = vpop.f32.mrb[0].mxu0
      %v294 = vadd.f32 0.0, %v293
      %v295 = vpop.f32.mrb[0].mxu0
      %296 = vmatprep.mubr.f32.mxu0 0.0
      %297 = vmatmul.mubr.f32.gmra.mrb[0].mxu0 %v193
      %v298 = vpop.f32.mrb[0].mxu0
      %v299 = vadd.f32 0.0, %v298
      %v300 = vpop.f32.mrb[0].mxu0
      %301 = vmatprep.mubr.f32.mxu0 0.0
      %302 = vmatmul.mubr.f32.gmra.mrb[0].mxu0 %v196
      %v303 = vpop.f32.mrb[0].mxu0
      %v304 = vadd.f32 0.0, %v303
      %v305 = vpop.f32.mrb[0].mxu0
      %306 = vmatprep.mubr.f32.mxu0 0.0
      %307 = vmatmul.mubr.f32.gmra.mrb[0].mxu0 %v199
      %v308 = vpop.f32.mrb[0].mxu0
      %v309 = vadd.f32 0.0, %v308
      %v310 = vpop.f32.mrb[0].mxu0
      %311 = vmatprep.mubr.f32.mxu0 0.0
      %312 = vmatmul.mubr.f32.gmra.mrb[0].mxu0 %v202
      %v313 = vpop.f32.mrb[0].mxu0
      %v314 = vadd.f32 0.0, %v313
      %v315 = vpop.f32.mrb[0].mxu0
      %316 = vmatprep.mubr.f32.mxu0 0.0
      %317 = vmatmul.mubr.f32.gmra.mrb[0].mxu0 %v205
      %v318 = vpop.f32.mrb[0].mxu0
      %v319 = vadd.f32 0.0, %v318
      %v320 = vpop.f32.mrb[0].mxu0
      %321 = vmatprep.mubr.f32.mxu0 0.0
      %322 = vmatmul.mubr.f32.gmra.mrb[0].mxu0 %v208
      %v323 = vpop.f32.mrb[0].mxu0
      %v324 = vadd.f32 0.0, %v323
      %v325 = vpop.f32.mrb[0].mxu0
      %326 = vmatprep.mubr.f32.mxu0 0.0
      %327 = vmatmul.mubr.f32.gmra.mrb[0].mxu0 %v211
      %v328 = vpop.f32.mrb[0].mxu0
      %v329 = vadd.f32 0.0, %v328
      %v330 = vpop.f32.mrb[0].mxu0
      %331 = vmatprep.mubr.f32.mxu0 0.0
      %332 = vmatmul.mubr.f32.gmra.mrb[0].mxu0 %v214
      %v333 = vpop.f32.mrb[0].mxu0
      %v334 = vadd.f32 0.0, %v333
      %v335 = vpop.f32.mrb[0].mxu0
      %336 = vmatprep.mubr.f32.mxu0 0.0
      %337 = vmatmul.mubr.f32.gmra.mrb[0].mxu0 %v217
      %v338 = vpop.f32.mrb[0].mxu0
      %v339 = vadd.f32 0.0, %v338
      %v340 = vpop.f32.mrb[0].mxu0
      %341 = vmatprep.mubr.f32.mxu0 0.0
      %342 = vmatmul.mubr.f32.gmra.mrb[0].mxu0 %v220
      %v343 = vpop.f32.mrb[0].mxu0
      %v344 = vadd.f32 0.0, %v343
      %v345 = vpop.f32.mrb[0].mxu0
      %346 = vdwg.mxu0
      %351 = vrot.lane.b32.xlu0 %v329, 127
      %v352 = vpop.permute.xlu0 %351
      %353 = vrot.lane.b32.xlu0 %v334, 127
      %v354 = vpop.permute.xlu0 %353
      %355 = vrot.lane.b32.xlu0 %v339, 127
      %v356 = vpop.permute.xlu0 %355
      %357 = vrot.lane.b32.xlu0 %v344, 127
      %v358 = vpop.permute.xlu0 %357
      %v363 = vadd.f32 %v309, %v352
      %v364 = vadd.f32 %v314, %v354
      %v365 = vadd.f32 %v319, %v356
      %v366 = vadd.f32 %v324, %v358
      %368 = vrot.lane.b32.xlu0 %v289, 127
      %v369 = vpop.permute.xlu0 %368
      %v371 = vmax.f32 %v289, %v363
      %v372 = vmax.f32 %v294, %v364
      %v373 = vmax.f32 %v299, %v365
      %v374 = vmax.f32 %v304, %v366
      %v375 = vmax.f32 %v371, %v294
      %v376 = vmax.f32 %v372, %v299
      %v377 = vmax.f32 %v373, %v304
      %v378 = vmax.f32 %v374, %v369
      %v379 = vmax.f32 %v375, 0.0
      %v380 = vmax.f32 %v376, 0.0
      %v381 = vmax.f32 %v377, 0.0
      %v382 = vmax.f32 %v378, 0.0
      %v383 = vld [vmem:[%s2] sm:$0xff]
      %v384 = vld [vmem:[%s2 + $0x8] sm:$0xff]
      %v385 = vld [vmem:[%s2 + $0x10] sm:$0xff]
      %v386 = vld [vmem:[%s2 + $0x18] sm:$0xff]
      %v387 = vld [vmem:[%s2 + $0x20] sm:$0xff]
      %v388 = vld [vmem:[%s2 + $0x28] sm:$0xff]
      %vm389 = vcmask 261120
      %v391 = vsel %vm389, %v383, 0
      %v394 = vsel %vm389, %v384, 0
      %v397 = vsel %vm389, %v385, 0
      %v400 = vsel %vm389, %v386, 0
      %v403 = vsel %vm389, %v387, 0
      %v406 = vsel %vm389, %v388, 0
      %408 = vmatprep.subr.mxu0 0.0
      %409 = vmatpush1.msra.mxu0 %v379
      %410 = vmatprep.subr.mxu0 0.0
      %411 = vmatpush1.msra.mxu0 %v380
      %412 = vmatprep.subr.mxu0 0.0
      %413 = vmatpush1.msra.mxu0 %v381
      %414 = vmatprep.subr.mxu0 0.0
      %415 = vmatpush1.msra.mxu0 %v382
      %416 = vmatprep.subr.mxu0 0.0
      %417 = vmatpush1.msra.mxu0 0.0
      %418 = vmatprep.subr.mxu0 0.0
      %419 = vmatpush1.msra.mxu0 0.0
      %420 = vmatprep.subr.mxu0 0.0
      %421 = vmatpush1.msra.mxu0 0.0
      %422 = vmatprep.subr.mxu0 0.0
      %423 = vmatpush1.msra.mxu0 0.0
      %424 = vmatprep.subr.mxu0 0.0
      %425 = vmatpush1.msra.mxu0 0.0
      %426 = vmatprep.subr.mxu0 0.0
      %427 = vmatpush1.msra.mxu0 0.0
      %428 = vmatprep.subr.mxu0 0.0
      %429 = vmatpush1.msra.mxu0 0.0
      %430 = vmatprep.subr.mxu0 0.0
      %431 = vmatpush1.msra.mxu0 0.0
      %432 = vmatprep.subr.mxu0 0.0
      %433 = vmatpush1.msra.mxu0 0.0
      %434 = vmatprep.subr.mxu0 0.0
      %435 = vmatpush1.msra.mxu0 0.0
      %436 = vmatprep.subr.mxu0 0.0
      %437 = vmatpush1.msra.mxu0 0.0
      %438 = vmatprep.subr.mxu0 0.0
      %439 = vmatpush1.msra.mxu0 0.0
      %440 = vmatprep.subr.mxu0 0.0
      %441 = vmatpush1.msra.mxu0 0.0
      %442 = vmatprep.subr.mxu0 0.0
      %443 = vmatpush1.msra.mxu0 0.0
      %444 = vmatprep.subr.mxu0 0.0
      %445 = vmatpush1.msra.mxu0 0.0
      %446 = vmatprep.subr.mxu0 0.0
      %447 = vmatpush1.msra.mxu0 0.0
      %448 = vmatprep.subr.mxu0 0.0
      %449 = vmatpush1.msra.mxu0 0.0
      %450 = vmatprep.subr.mxu0 0.0
      %451 = vmatpush1.msra.mxu0 0.0
      %452 = vmatprep.subr.mxu0 0.0
      %453 = vmatpush1.msra.mxu0 0.0
      %454 = vmatprep.subr.mxu0 0.0
      %455 = vmatpush1.msra.mxu0 0.0
      %456 = vmatprep.subr.mxu0 0.0
      %457 = vmatpush1.msra.mxu0 0.0
      %458 = vmatprep.subr.mxu0 0.0
      %459 = vmatpush1.msra.mxu0 0.0
      %460 = vmatprep.subr.mxu0 0.0
      %461 = vmatpush1.msra.mxu0 0.0
      %462 = vmatprep.subr.mxu0 0.0
      %463 = vmatpush1.msra.mxu0 0.0
      %464 = vmatprep.subr.mxu0 0.0
      %465 = vmatpush1.msra.mxu0 0.0
      %466 = vmatprep.subr.mxu0 0.0
      %467 = vmatpush1.msra.mxu0 0.0
      %468 = vmatprep.subr.mxu0 0.0
      %469 = vmatpush1.msra.mxu0 0.0
      %470 = vmatprep.subr.mxu0 0.0
      %471 = vmatpush1.msra.mxu0 0.0
      %472 = vmatprep.mubr.f32.mxu0 0.0
      %473 = vmatmul.mubr.f32.gmra.mrb[0].mxu0 %v391
      %v474 = vpop.f32.mrb[0].mxu0
      %v475 = vadd.f32 0.0, %v474
      %v476 = vpop.f32.mrb[0].mxu0
      %477 = vmatprep.mubr.f32.mxu0 0.0
      %478 = vmatmul.mubr.f32.gmra.mrb[0].mxu0 %v394
      %v479 = vpop.f32.mrb[0].mxu0
      %v480 = vadd.f32 0.0, %v479
      %v481 = vpop.f32.mrb[0].mxu0
      %482 = vmatprep.mubr.f32.mxu0 0.0
      %483 = vmatmul.mubr.f32.gmra.mrb[0].mxu0 %v397
      %v484 = vpop.f32.mrb[0].mxu0
      %v485 = vadd.f32 0.0, %v484
      %v486 = vpop.f32.mrb[0].mxu0
      %487 = vmatprep.mubr.f32.mxu0 0.0
      %488 = vmatmul.mubr.f32.gmra.mrb[0].mxu0 %v400
      %v489 = vpop.f32.mrb[0].mxu0
      %v490 = vadd.f32 0.0, %v489
      %v491 = vpop.f32.mrb[0].mxu0
      %492 = vmatprep.mubr.f32.mxu0 0.0
      %493 = vmatmul.mubr.f32.gmra.mrb[0].mxu0 %v403
      %v494 = vpop.f32.mrb[0].mxu0
      %v495 = vadd.f32 0.0, %v494
      %v496 = vpop.f32.mrb[0].mxu0
      %497 = vmatprep.mubr.f32.mxu0 0.0
      %498 = vmatmul.mubr.f32.gmra.mrb[0].mxu0 %v406
      %v499 = vpop.f32.mrb[0].mxu0
      %v500 = vadd.f32 0.0, %v499
      %v501 = vpop.f32.mrb[0].mxu0
      %502 = vdwg.mxu0
      %505 = vrot.lane.b32.xlu0 %v495, 127
      %v506 = vpop.permute.xlu0 %505
      %507 = vrot.lane.b32.xlu0 %v500, 127
      %v508 = vpop.permute.xlu0 %507
      %v511 = vadd.f32 %v485, %v506
      %v512 = vadd.f32 %v490, %v508
      %v513 = vmax.f32 %v475, %v511
      %v514 = vmax.f32 %v480, %v512
      %517 = vrot.lane.b32.xlu0 %v475, 127
      %v518 = vpop.permute.xlu0 %517
      %519 = vrot.lane.b32.xlu0 %v480, 127
      %v520 = vpop.permute.xlu0 %519
      %v523 = vmax.f32 %v513, %v518
      %v524 = vmax.f32 %v514, %v520
      %v525 = vmax.f32 %v523, 0.0
      %v526 = vmax.f32 %v524, 0.0
      %vm527 = vcmask 113664
      %528 = vst.msk [vmem:[%s170] sm:$0xff] %vm527, %v525
      %529 = vst.msk [vmem:[%s170 + $0x8] sm:$0xff] %vm527, %v526
      %p530 = scmp.lt.s32.totalorder %s14, 1
      %s531 = scalar_select %p530, %s14, 1
      %s532 = smul.addr %s531, 2
      %s533 = smul.addr %s532, 8
      %s534 = scalar_lea.vmem %s3, %s533
      // Predicated region
      $region33: #{encoder_forward.1} parent=31 // pred_check
        %p535 = pneg %p100
      $region34: #{encoder_forward.1} parent=31 // pred_check_branch
        %537 = sbr.rel (%p535) target = $region36
      $region35: #{encoder_forward.1} parent=31 // pred_region
        _
      $region36: #{encoder_forward.1} parent=31 // pred_fallthru
        _
    $region32: #{encoder_forward.1} parent=5 // pred_fallthru
      _
    %p538 = scmp.le.s32.totalorder 2, %s9
    // Predicated region
    $region37: #{encoder_forward.1} parent=5 // pred_check
      %p539 = pneg %p538
    $region38: #{encoder_forward.1} parent=5 // pred_check_branch
      %541 = sbr.rel (%p539) target = $region40
    $region39: #{encoder_forward.1} parent=5 // pred_region
      %s542 = ssub.s32 %s9, 2
      // Predicated region
      $region41: #{encoder_forward.1} parent=39 // pred_check
        %p543 = pneg %p106
      $region42: #{encoder_forward.1} parent=39 // pred_check_branch
        %545 = sbr.rel (%p543) target = $region44
      $region43: #{encoder_forward.1} parent=39 // pred_region
        %p546 = scmp.lt.s32.totalorder %s15, 1
        %s547 = scalar_select %p546, %s15, 1
        %s548 = smul.addr %s547, 2
        %s549 = smul.addr %s548, 8
        %s550 = scalar_lea.vmem %s3, %s549
      $region44: #{encoder_forward.1} parent=39 // pred_fallthru
        _
    $region40: #{encoder_forward.1} parent=5 // pred_fallthru
      _
  $region6: #{encoder_forward.1} parent=0 // loop_footer
    %s13 = sadd.s32 1, %s9
  $region7: #{encoder_forward.1} parent=0 // loop_footer_branch
    %8 = sbr.rel target = $region3
  $region8: #{encoder_forward.1} parent=0 // loop_exit
    _

</llo_original>
